<compile_context>
chip_gen: v5e
topology: v5e:2x2
jax: 0.10.0
libtpu: 0.0.40
codegen_flags: <defaults>
</compile_context>

<pallas_src>
import functools
import math

import jax
import jax.numpy as jnp
from jax import lax
from jax.experimental import pallas as pl
from jax.experimental.pallas import tpu as pltpu


_LANE = 128                      # lane tile (last-dim granularity)
_ZEROS = 56                      # sinc resampling half width (julius / denoiser default)
_VMEM_LIMIT = 32 * 1024 * 1024   # explicit scoped-VMEM limit (safe on v5e/v6e/v7x)


def _rup(x, m):
    return (x + m - 1) // m * m


def _pick_tile(n, cap=1024):
    """Pad n to a lane-tile multiple and pick the widest tile <= cap."""
    npad = _rup(n, _LANE)
    if npad <= cap:
        return npad, npad
    return _rup(n, cap), cap


def _pad2(a, rows, cols):
    return jnp.pad(a, ((0, rows - a.shape[0]), (0, cols - a.shape[1])))


def _bias_lanes(b, rows):
    """(C,) bias -> (rows, 128) f32 tile; kernels read lane 0 and broadcast."""
    bp = jnp.pad(b.astype(jnp.float32), (0, rows - b.shape[0]))
    return jnp.tile(bp[:, None], (1, _LANE))


# ----------------------------------------------------------------------------
# Pallas kernels
# ----------------------------------------------------------------------------
def _elu(x):
    # nn.ELU(alpha=1).  jnp.minimum keeps exp() finite (where evaluates both sides).
    return jnp.where(x > 0.0, x, jnp.exp(jnp.minimum(x, 0.0)) - 1.0)


def _encoder_block_kernel(wc_ref, bc_ref, wvg_ref, bvg_ref, p_ref, o_ref):
    """Fused encoder block: strided Conv1d (tap-stacked matmul, bf16 MXU, f32 acc)
    + ELU + packed 1x1 (value|gate) + GLU.  One grid step = one lane slab."""
    h1 = jnp.dot(wc_ref[...], p_ref[...], preferred_element_type=jnp.float32)
    h1 = _elu(h1 + bc_ref[:, 0:1])                      # f32 epilogue
    vg = jnp.dot(wvg_ref[...], h1.astype(wvg_ref.dtype),
                 preferred_element_type=jnp.float32) + bvg_ref[:, 0:1]
    hp = o_ref.shape[0]
    o_ref[...] = vg[:hp] * jax.nn.sigmoid(vg[hp:])


def _decoder_block_kernel(wvg_ref, bvg_ref, wt_ref, x_ref, s_ref, o_ref):
    """Fused decoder block: skip-add + packed 1x1 + GLU + ConvTranspose1d tap
    matmul.  The cheap overlap-add of the K taps stays in XLA glue."""
    xs = x_ref[...] + s_ref[...]                        # bf16
    vg = jnp.dot(wvg_ref[...], xs, preferred_element_type=jnp.float32) + bvg_ref[:, 0:1]
    hp = wvg_ref.shape[0] // 2
    glu = vg[:hp] * jax.nn.sigmoid(vg[hp:])
    o_ref[...] = jnp.dot(wt_ref[...], glu.astype(wt_ref.dtype),
                         preferred_element_type=jnp.float32)


def _resample_mm_kernel(a_ref, b_ref, t_ref, o_ref):
    """Sinc resampling: 128 outputs per frame from two adjacent 128-wide signal
    blocks times a 256x128 banded Toeplitz (split to avoid in-kernel concat)."""
    o_ref[...] = (jnp.dot(a_ref[...], t_ref[0:_LANE, :],
                          preferred_element_type=jnp.float32)
                  + jnp.dot(b_ref[...], t_ref[_LANE:2 * _LANE, :],
                            preferred_element_type=jnp.float32))


def _lstm_kernel(x_ref, wih_ref, whh_ref, b_ref, o_ref, xp_sc, h_sc, c_sc,
                 *, n_layers, bp, unroll):
    """Chunked 2-layer unidirectional LSTM.  Gate weights are fused (Dp, 4*Dp);
    layer-0's input projection is hoisted out of the time loop as one batched
    matmul per chunk; (h, c) persist in VMEM scratch across grid steps."""
    @pl.when(pl.program_id(0) == 0)
    def _():
        h_sc[...] = jnp.zeros_like(h_sc)
        c_sc[...] = jnp.zeros_like(c_sc)

    dp = h_sc.shape[-1]
    # Hoisted layer-0 input projection for the whole chunk (lane-dense matmul).
    xp_sc[...] = jnp.dot(x_ref[...], wih_ref[0], preferred_element_type=jnp.float32)

    n_steps = x_ref.shape[0] // bp

    def step(t, carry):
        row = pl.multiple_of(t * bp, bp)
        xg = xp_sc[pl.ds(row, bp), :]                   # (bp, 4*dp) pre-projected
        h = None
        for layer in range(n_layers):
            h = h_sc[layer]
            c = c_sc[layer]
            gates = (xg
                     + jnp.dot(h, whh_ref[layer], preferred_element_type=jnp.float32)
                     + b_ref[layer][0:1, :])
            i_g = jax.nn.sigmoid(gates[:, 0 * dp:1 * dp])   # PyTorch order i,f,g,o
            f_g = jax.nn.sigmoid(gates[:, 1 * dp:2 * dp])
            g_g = jnp.tanh(gates[:, 2 * dp:3 * dp])
            o_g = jax.nn.sigmoid(gates[:, 3 * dp:4 * dp])
            c = f_g * c + i_g * g_g
            h = o_g * jnp.tanh(c)
            h_sc[layer] = h
            c_sc[layer] = c
            if layer + 1 < n_layers:
                xg = jnp.dot(h, wih_ref[layer + 1],
                             preferred_element_type=jnp.float32)
        o_ref[pl.ds(row, bp), :] = h
        return carry

    lax.fori_loop(0, n_steps, step, 0, unroll=unroll)


# ----------------------------------------------------------------------------
# Wrappers (XLA glue limited to cheap slicing / padding / overlap-add)
# ----------------------------------------------------------------------------
def encoder_block_apply(x, blk):
    """x: (Cin, B, L) -> (h, B, Lout).  Conv1d(K, stride) + ELU + Conv1x1 + GLU."""
    cin, batch, length = x.shape
    K, S, h = blk["K"], blk["S"], blk["h"]
    lout = (length - K) // S + 1
    # Tap-stacked input: K strided slices (~K/S x data, no huge im2col gather).
    slabs = [x[:, :, k: k + (lout - 1) * S + 1: S] for k in range(K)]
    p = jnp.stack(slabs, axis=1).reshape(cin * K, batch * lout)

    hp, ckp = blk["wc"].shape
    n = batch * lout
    npad, tile = _pick_tile(n)
    p = jnp.pad(p, ((0, ckp - cin * K), (0, npad - n))).astype(jnp.bfloat16)

    out = pl.pallas_call(
        _encoder_block_kernel,
        out_shape=jax.ShapeDtypeStruct((hp, npad), jnp.float32),
        grid_spec=pltpu.PrefetchScalarGridSpec(
            num_scalar_prefetch=0,
            grid=(npad // tile,),
            in_specs=[
                pl.BlockSpec((hp, ckp), lambda j: (0, 0)),
                pl.BlockSpec((hp, _LANE), lambda j: (0, 0)),
                pl.BlockSpec((2 * hp, hp), lambda j: (0, 0)),
                pl.BlockSpec((2 * hp, _LANE), lambda j: (0, 0)),
                pl.BlockSpec((ckp, tile), lambda j: (0, j)),
            ],
            out_specs=pl.BlockSpec((hp, tile), lambda j: (0, j)),
        ),
        compiler_params=pltpu.CompilerParams(
            dimension_semantics=("parallel",), vmem_limit_bytes=_VMEM_LIMIT),
    )(blk["wc"], blk["bc"], blk["wvg"], blk["bvg"], p)
    return out[:h, :n].reshape(h, batch, lout)


def decoder_block_apply(x, skip, blk, stride):
    """x, skip: (h, B, L) -> (co, B, (L-1)*stride + K).
    skip-add + Conv1x1 + GLU + ConvTranspose1d (+ optional ReLU)."""
    h, batch, length = x.shape
    co, K = blk["co"], blk["K"]
    assert K == 2 * stride  # TODO(synk): general K != 2*stride needs full scatter-add.
    hp = blk["wvg"].shape[1]
    cokp = blk["wt"].shape[0]
    n = batch * length
    npad, tile = _pick_tile(n)
    xf = jnp.pad(x.reshape(h, n), ((0, hp - h), (0, npad - n))).astype(jnp.bfloat16)
    sf = jnp.pad(skip.reshape(h, n), ((0, hp - h), (0, npad - n))).astype(jnp.bfloat16)

    contrib = pl.pallas_call(
        _decoder_block_kernel,
        out_shape=jax.ShapeDtypeStruct((cokp, npad), jnp.float32),
        grid_spec=pltpu.PrefetchScalarGridSpec(
            num_scalar_prefetch=0,
            grid=(npad // tile,),
            in_specs=[
                pl.BlockSpec((2 * hp, hp), lambda j: (0, 0)),
                pl.BlockSpec((2 * hp, _LANE), lambda j: (0, 0)),
                pl.BlockSpec((cokp, hp), lambda j: (0, 0)),
                pl.BlockSpec((hp, tile), lambda j: (0, j)),
                pl.BlockSpec((hp, tile), lambda j: (0, j)),
            ],
            out_specs=pl.BlockSpec((cokp, tile), lambda j: (0, j)),
        ),
        compiler_params=pltpu.CompilerParams(
            dimension_semantics=("parallel",), vmem_limit_bytes=_VMEM_LIMIT),
    )(blk["wvg"], blk["bvg"], blk["wt"], xf, sf)

    # TODO(synk): overlap-add still in XLA glue (two small transposes per layer);
    # a per-stride-phase dual-output kernel would remove them.
    contrib = contrib[:co * K, :n].reshape(co, K, batch, length)
    first = contrib[:, :stride].transpose(0, 2, 3, 1)    # taps 0..S-1  -> block t
    second = contrib[:, stride:].transpose(0, 2, 3, 1)   # taps S..2S-1 -> block t+1
    blocks = (jnp.pad(first, ((0, 0), (0, 0), (0, 1), (0, 0)))
              + jnp.pad(second, ((0, 0), (0, 0), (1, 0), (0, 0))))
    out = blocks.reshape(co, batch, (length + 1) * stride) + blk["tb"][:, None, None]
    if blk["relu"]:
        out = jnp.maximum(out, 0.0)
    return out


def sliding_sinc_conv(rows, toep, zeros):
    """rows: (R, T).  out[r, t] = sum_j pad(rows, zeros)[r, t + off + j] * k[j]
    (off baked into the Toeplitz).  Each 128-sample output frame reads two
    adjacent 128-wide signal blocks directly inside the kernel (no HBM gather)."""
    R, T = rows.shape
    nf = -(-T // _LANE)
    Rp = _rup(R, 8)
    TR = Rp if Rp <= 512 else 512
    Rp = _rup(Rp, TR)
    sig_len = (nf + 1) * _LANE
    sig = jnp.pad(rows.astype(jnp.float32),
                  ((0, Rp - R), (zeros, sig_len - zeros - T)))

    out = pl.pallas_call(
        _resample_mm_kernel,
        out_shape=jax.ShapeDtypeStruct((Rp, nf * _LANE), jnp.float32),
        grid_spec=pltpu.PrefetchScalarGridSpec(
            num_scalar_prefetch=0,
            grid=(Rp // TR, nf),
            in_specs=[
                pl.BlockSpec((TR, _LANE), lambda r, f: (r, f)),
                pl.BlockSpec((TR, _LANE), lambda r, f: (r, f + 1)),
                pl.BlockSpec((2 * _LANE, _LANE), lambda r, f: (0, 0)),
            ],
            out_specs=pl.BlockSpec((TR, _LANE), lambda r, f: (r, f)),
        ),
        compiler_params=pltpu.CompilerParams(
            dimension_semantics=("parallel", "parallel"),
            vmem_limit_bytes=_VMEM_LIMIT),
    )(sig, sig, toep)
    return out[:R, :T]


def upsample2(x, toep_up, zeros=_ZEROS):
    """x: (C, B, T) -> (C, B, 2T).  julius/denoiser sinc upsampling by 2."""
    # TODO(synk): fuse the two cascaded resample=4 stages into one polyphase kernel.
    C, B, T = x.shape
    rows = x.reshape(C * B, T)
    interp = sliding_sinc_conv(rows, toep_up, zeros)     # off=1 baked into toep_up
    return jnp.stack([rows, interp], axis=-1).reshape(C, B, 2 * T)


def downsample2(x, toep_dn, zeros=_ZEROS):
    """x: (C, B, T) -> (C, B, ceil(T/2)).  julius/denoiser sinc downsampling by 2."""
    C, B, T = x.shape
    if T % 2 != 0:
        x = jnp.pad(x, ((0, 0), (0, 0), (0, 1)))
        T += 1
    xeven = x[..., ::2]
    xodd = x[..., 1::2]
    rows = xodd.reshape(C * B, T // 2)
    conv = sliding_sinc_conv(rows, toep_dn, zeros).reshape(C, B, T // 2)
    return (xeven + conv) * 0.5


def lstm_apply(lp, xl):
    """2-layer unidirectional nn.LSTM.  xl: (L, B, D) -> (L, B, D)."""
    L, B, D = xl.shape
    Bp = _rup(B, 8)
    Dp = lp["Dp"]
    nl = lp["n_layers"]
    Tc = L if L <= 128 else 128          # time chunk per grid step (caps VMEM)
    Lp = _rup(L, Tc)
    xp = jnp.pad(xl.astype(jnp.float32), ((0, Lp - L), (0, Bp - B), (0, Dp - D)))
    x2 = xp.reshape(Lp * Bp, Dp)         # 2-D (time*batch, feature) layout

    kern = functools.partial(_lstm_kernel, n_layers=nl, bp=Bp, unroll=min(8, Tc))
    out = pl.pallas_call(
        kern,
        out_shape=jax.ShapeDtypeStruct((Lp * Bp, Dp), jnp.float32),
        grid_spec=pltpu.PrefetchScalarGridSpec(
            num_scalar_prefetch=0,
            grid=(Lp // Tc,),
            in_specs=[
                pl.BlockSpec((Tc * Bp, Dp), lambda i: (i, 0)),
                pl.BlockSpec((nl, Dp, 4 * Dp), lambda i: (0, 0, 0)),
                pl.BlockSpec((nl, Dp, 4 * Dp), lambda i: (0, 0, 0)),
                pl.BlockSpec((nl, 8, 4 * Dp), lambda i: (0, 0, 0)),
            ],
            out_specs=pl.BlockSpec((Tc * Bp, Dp), lambda i: (i, 0)),
            scratch_shapes=[
                pltpu.VMEM((Tc * Bp, 4 * Dp), jnp.float32),   # hoisted layer-0 proj
                pltpu.VMEM((nl, Bp, Dp), jnp.float32),        # h (persists across chunks)
                pltpu.VMEM((nl, Bp, Dp), jnp.float32),        # c
            ],
        ),
        compiler_params=pltpu.CompilerParams(
            dimension_semantics=("arbitrary",), vmem_limit_bytes=_VMEM_LIMIT),
    )(x2, lp["wih"], lp["whh"], lp["b"])
    return out.reshape(Lp, Bp, Dp)[:L, :B, :D]


# ----------------------------------------------------------------------------
# Sinc filter / banded Toeplitz
# ----------------------------------------------------------------------------
def sinc_kernel(zeros=_ZEROS):
    win_len = 4 * zeros + 1
    n = jnp.arange(win_len, dtype=jnp.float32)
    win = 0.5 - 0.5 * jnp.cos(2.0 * jnp.pi * n / (win_len - 1))   # hann, periodic=False
    winodd = win[1::2]
    t = jnp.linspace(-zeros + 0.5, zeros - 0.5, 2 * zeros, dtype=jnp.float32) * jnp.pi
    return jnp.where(t == 0, 1.0, jnp.sin(t) / t) * winodd         # (2*zeros,)


def build_toeplitz(kern, off):
    """(256, 128) band matrix so [blockF | blockF+1] @ T == sliding conv with kern,
    shifted by `off` samples into the zero-padded signal."""
    taps = kern.shape[0]
    t = jnp.arange(_LANE)
    j = jnp.arange(taps)
    rows = off + t[None, :] + j[:, None]                 # < 256 for off <= 17
    cols = jnp.broadcast_to(t[None, :], (taps, _LANE))
    vals = jnp.broadcast_to(kern[:, None].astype(jnp.float32), (taps, _LANE))
    return jnp.zeros((2 * _LANE, _LANE), jnp.float32).at[rows, cols].set(vals)


# ----------------------------------------------------------------------------
# InEnhancer_2ch forward
# ----------------------------------------------------------------------------
def valid_length(length, cfg):
    depth, K, S, resample = (cfg["depth"], cfg["kernel_size"],
                             cfg["stride"], cfg["resample"])
    length = math.ceil(length * resample)
    for _ in range(depth):
        length = math.ceil((length - K) / S) + 1
        length = max(length, 1)
    for _ in range(depth):
        length = (length - 1) * S + K
    return int(math.ceil(length / resample))


def in_enhancer_2ch_forward(params, cfg, mix):
    """mix: (B, chin//2, T) -> (B, chout, T).  Faithful to InEnhancer_2ch.forward."""
    assert mix.ndim == 3  # TODO(synk): 2-D (B, T) input path (unsqueeze) omitted.
    x = jnp.transpose(mix, (1, 0, 2)).astype(jnp.float32)       # channel-major (C,B,T)
    x = jnp.concatenate([x, -x], axis=0)                        # th.cat([mix,-mix], 1)
    assert x.shape[0] == cfg["chin"]

    if cfg["normalize"]:
        mono = jnp.mean(x, axis=0, keepdims=True)               # mean over channels
        std = jnp.std(mono, axis=-1, keepdims=True, ddof=1)     # torch unbiased std
        x = x / (cfg["floor"] + std)
    else:
        std = 1.0

    length = x.shape[-1]
    x = jnp.pad(x, ((0, 0), (0, 0), (0, valid_length(length, cfg) - length)))

    if cfg["resample"] >= 2:
        x = upsample2(x, params["toep_up"])
    if cfg["resample"] == 4:
        x = upsample2(x, params["toep_up"])

    skips = []
    for blk in params["encoder"]:
        x = encoder_block_apply(x, blk)
        skips.append(x)

    xl = jnp.transpose(x, (2, 1, 0))                            # (L, B, C)
    xl = lstm_apply(params["lstm"], xl)
    x = jnp.transpose(xl, (2, 1, 0))                            # (C, B, L)

    for blk in params["decoder"]:
        skip = skips.pop(-1)
        x = decoder_block_apply(x, skip[:, :, : x.shape[-1]], blk, cfg["stride"])

    if cfg["resample"] >= 2:
        x = downsample2(x, params["toep_dn"])
    if cfg["resample"] == 4:
        x = downsample2(x, params["toep_dn"])

    x = x[..., :length]
    x = std * x
    return jnp.transpose(x, (1, 0, 2))                          # back to (B, chout, T)


# ----------------------------------------------------------------------------
# Deterministic parameter init (PyTorch-style uniform + rescale_module)
# Weights are reshaped / transposed / padded / packed / cast ONCE here.
# ----------------------------------------------------------------------------
def init_params(key, cfg):
    chin, chout, hidden = cfg["chin"], cfg["chout"], cfg["hidden"]
    depth, K, S = cfg["depth"], cfg["kernel_size"], cfg["stride"]
    growth, max_hidden = cfg["growth"], cfg["max_hidden"]
    reference = cfg["rescale"]
    assert cfg["glu"] and cfg["causal"]
    # TODO(synk): glu=False (plain ReLU 1x1) and causal=False (BiLSTM+Linear) variants
    # are not implemented.

    keys = iter(jax.random.split(key, 16 * depth + 16))

    def unif(shape, fan_in):
        bound = 1.0 / math.sqrt(fan_in)
        return jax.random.uniform(next(keys), shape, jnp.float32, -bound, bound)

    def rescale(w, b):
        if not reference:
            return w, b
        scale = jnp.sqrt(jnp.std(w, ddof=1) / reference)        # rescale_conv
        return w / scale, b / scale

    encoder, decoder = [], []
    ci, co, h = chin, chout, hidden
    for index in range(depth):
        hp, ckp, cokp = _rup(h, 8), _rup(ci * K, 8), _rup(co * K, 8)

        cw, cb = rescale(unif((h, ci, K), ci * K), unif((h,), ci * K))
        mw, mb = rescale(unif((2 * h, h), h), unif((2 * h,), h))
        encoder.append(dict(
            h=h, K=K, S=S,
            wc=_pad2(cw.reshape(h, ci * K), hp, ckp).astype(jnp.bfloat16),
            bc=_bias_lanes(cb, hp),
            wvg=jnp.concatenate([_pad2(mw[:h], hp, hp),
                                 _pad2(mw[h:], hp, hp)], axis=0).astype(jnp.bfloat16),
            bvg=jnp.concatenate([_bias_lanes(mb[:h], hp),
                                 _bias_lanes(mb[h:], hp)], axis=0),
        ))

        dmw, dmb = rescale(unif((2 * h, h), h), unif((2 * h,), h))
        tw, tb = rescale(unif((h, co, K), co * K), unif((co,), co * K))
        decoder.insert(0, dict(
            co=co, K=K, relu=(index > 0),
            wvg=jnp.concatenate([_pad2(dmw[:h], hp, hp),
                                 _pad2(dmw[h:], hp, hp)], axis=0).astype(jnp.bfloat16),
            bvg=jnp.concatenate([_bias_lanes(dmb[:h], hp),
                                 _bias_lanes(dmb[h:], hp)], axis=0),
            wt=_pad2(jnp.transpose(tw, (1, 2, 0)).reshape(co * K, h),
                     cokp, hp).astype(jnp.bfloat16),
            tb=tb,
        ))
        co, ci = h, h
        h = min(int(growth * h), max_hidden)

    # 2-layer unidirectional LSTM at the bottleneck (BLSTM(dim, bi=False)).
    D = ci
    Dp = _rup(D, _LANE)
    n_layers = 2
    wih = jnp.zeros((n_layers, Dp, 4 * Dp), jnp.float32)   # gates fused along columns
    whh = jnp.zeros((n_layers, Dp, 4 * Dp), jnp.float32)
    bias = jnp.zeros((n_layers, 8, 4 * Dp), jnp.float32)
    for layer in range(n_layers):
        w_ih = unif((4 * D, D), D)
        w_hh = unif((4 * D, D), D)
        b_ih = unif((4 * D,), D)
        b_hh = unif((4 * D,), D)
        for g in range(4):                       # PyTorch gate order: i, f, g, o
            sl = slice(g * D, (g + 1) * D)
            wih = wih.at[layer, :D, g * Dp:g * Dp + D].set(w_ih[sl].T)
            whh = whh.at[layer, :D, g * Dp:g * Dp + D].set(w_hh[sl].T)
            bias = bias.at[layer, :, g * Dp:g * Dp + D].set(
                jnp.broadcast_to((b_ih[sl] + b_hh[sl])[None, :], (8, D)))
    lstm = dict(wih=wih, whh=whh, b=bias, Dp=Dp, n_layers=n_layers)

    kern = sinc_kernel(_ZEROS)
    return dict(encoder=encoder, decoder=decoder, lstm=lstm,
                toep_up=build_toeplitz(kern, off=1),    # F.conv1d(pad=zeros)[..., 1:]
                toep_dn=build_toeplitz(kern, off=0))    # F.conv1d(pad=zeros)[..., :-1]


# ----------------------------------------------------------------------------
if __name__ == "__main__":
    cfg = dict(chin=2, chout=1, hidden=8, depth=3, kernel_size=8, stride=4,
               causal=True, resample=4, growth=2, max_hidden=10000,
               normalize=True, glu=True, rescale=0.1, floor=1e-3)

    key = jax.random.PRNGKey(0)
    pkey, xkey = jax.random.split(key)
    params = init_params(pkey, cfg)

    # Input (B, chin//2, T): forward concatenates [mix, -mix] along the channel dim.
    mix = jax.random.normal(xkey, (2, 1, 64), jnp.float32)

    out = jax.block_until_ready(in_enhancer_2ch_forward(params, cfg, mix))
    assert out.shape == (2, cfg["chout"], 64), out.shape
    assert bool(jnp.all(jnp.isfinite(out)))
    # With normalize=True the 2-channel (x, -x) trick makes the channel mean -- and
    # hence the normalization std -- exactly zero, so the reference module returns
    # std * x == 0.  Verify this faithfully reproduced behaviour.
    assert bool(jnp.all(out == 0.0))

    # Also exercise the non-degenerate numeric path (normalize=False) end to end.
    cfg_nn = dict(cfg, normalize=False)
    out2 = jax.block_until_ready(in_enhancer_2ch_forward(params, cfg_nn, mix))
    assert out2.shape == (2, cfg["chout"], 64), out2.shape
    assert bool(jnp.all(jnp.isfinite(out2)))
    assert bool(jnp.any(out2 != 0.0))

    print("KERNEL_OK")
</pallas_src>

<mosaic_0001>
module attributes {stable_mosaic.version = 11 : i64} {
  func.func @_resample_mm_kernel(%arg0: i32, %arg1: i32, %arg2: memref<8x128xf32, #tpu.memory_space<vmem>>, %arg3: memref<8x128xf32, #tpu.memory_space<vmem>>, %arg4: memref<256x128xf32, #tpu.memory_space<vmem>>, %arg5: memref<8x128xf32, #tpu.memory_space<vmem>>) attributes {dimension_semantics = [#tpu.dimension_semantics<parallel>, #tpu.dimension_semantics<parallel>], iteration_bounds = array<i64: 1, 1>, scalar_prefetch = 0 : i64, scratch_operands = 0 : i64, tpu.core_type = #tpu.core_type<tc>, window_params = [{transform_indices = @transform_0, window_bounds = array<i64: 8, 128>}, {transform_indices = @transform_1, window_bounds = array<i64: 8, 128>}, {pipeline_mode = #tpu.pipeline_mode<synchronous>, transform_indices = @transform_2, window_bounds = array<i64: 256, 128>}, {transform_indices = @transform_3, window_bounds = array<i64: 8, 128>}]} {
    %c0 = arith.constant 0 : index
    %c0_0 = arith.constant 0 : index
    %0 = vector.load %arg2[%c0, %c0_0] : memref<8x128xf32, #tpu.memory_space<vmem>>, vector<8x128xf32>
    %c0_1 = arith.constant 0 : index
    %c0_2 = arith.constant 0 : index
    %1 = vector.load %arg4[%c0_1, %c0_2] : memref<256x128xf32, #tpu.memory_space<vmem>>, vector<128x128xf32>
    %cst = arith.constant dense<0.000000e+00> : vector<8x128xf32>
    %2 = tpu.matmul %0, %1, %cst {dimension_numbers = #tpu.dot_dimension_numbers<[1], [0], [0], [1], [0, 0, 1, 1], [], []>} : vector<8x128xf32>, vector<128x128xf32>, vector<8x128xf32> -> vector<8x128xf32>
    %c0_3 = arith.constant 0 : index
    %c0_4 = arith.constant 0 : index
    %3 = vector.load %arg3[%c0_3, %c0_4] : memref<8x128xf32, #tpu.memory_space<vmem>>, vector<8x128xf32>
    %c128 = arith.constant 128 : index
    %c0_5 = arith.constant 0 : index
    %4 = vector.load %arg4[%c128, %c0_5] : memref<256x128xf32, #tpu.memory_space<vmem>>, vector<128x128xf32>
    %cst_6 = arith.constant dense<0.000000e+00> : vector<8x128xf32>
    %5 = tpu.matmul %3, %4, %cst_6 {dimension_numbers = #tpu.dot_dimension_numbers<[1], [0], [0], [1], [0, 0, 1, 1], [], []>} : vector<8x128xf32>, vector<128x128xf32>, vector<8x128xf32> -> vector<8x128xf32>
    %6 = arith.addf %2, %5 : vector<8x128xf32>
    %c0_7 = arith.constant 0 : index
    %c0_8 = arith.constant 0 : index
    %7 = vector.load %arg5[%c0_7, %c0_8] : memref<8x128xf32, #tpu.memory_space<vmem>>, vector<8x128xf32>
    tpu.vector_store %arg5[%c0_7, %c0_8], %6 {strides = array<i32>} : memref<8x128xf32, #tpu.memory_space<vmem>>, vector<8x128xf32>,
    return
  }
  func.func @transform_0(%arg0: i32, %arg1: i32) -> (i32, i32) {
    %c0_i32 = arith.constant 0 : i32
    return %arg0, %arg1 : i32, i32
  }
  func.func @transform_1(%arg0: i32, %arg1: i32) -> (i32, i32) {
    %c1_i32 = arith.constant 1 : i32
    %0 = arith.addi %arg1, %c1_i32 : i32
    %c0_i32 = arith.constant 0 : i32
    return %arg0, %0 : i32, i32
  }
  func.func @transform_2(%arg0: i32, %arg1: i32) -> (i32, i32) {
    %c0_i32 = arith.constant 0 : i32
    %c0_i32_0 = arith.constant 0 : i32
    %c0_i32_1 = arith.constant 0 : i32
    return %c0_i32, %c0_i32_0 : i32, i32
  }
  func.func @transform_3(%arg0: i32, %arg1: i32) -> (i32, i32) {
    %c0_i32 = arith.constant 0 : i32
    return %arg0, %arg1 : i32, i32
  }
}

</mosaic_0001>

<llo_original>
// kernel: tpu_custom_call.1
$region0: #{tpu_custom_call.1}
  #allocation0 [shape = 'u32[]', space=smem, size = 0x4, offset = 0x4, fixed_abs, tag = 'smem constant byte address 0x4 - core index']
  #allocation1 [shape = 'u32[72,128]{1,0:T(1,128)}', space=vmem, size = 0x9000, scoped, tag = 'internal scratch']
  %s0 = inlined_call_operand.hbm [shape: f32[8,256], index: 0, kind: input, shape index: {}]
  %s1 = inlined_call_operand.hbm [shape: f32[8,256], index: 1, kind: input, shape index: {}]
  %s2 = inlined_call_operand.hbm [shape: f32[256,128], index: 2, kind: input, shape index: {}]
  %s3 = inlined_call_operand.hbm [shape: f32[8,128], index: 3, kind: output, shape index: {}]
  %s4 = sld [smem:[#allocation0]]
  $region34: #{tpu_custom_call.1} parent=0
    _
  %s6 = ssub.s32 1, %s4
  %s7 = scalar_select 0, %s6, %s4
  $region1: #{tpu_custom_call.1} parent=0
    #allocation2 [shape = 'u8[4096]{0}', space=vmem, size = 0x1000, scoped, tag = 'input window, operand 0, single buffered']
    #allocation3 [shape = 's32[1]{0}', space=sflag, size = 0x4, scoped, tag = 'scoped memory for tpu_custom_call.1']
    #allocation4 [shape = 's32[1]{0}', space=sflag, size = 0x4, scoped, tag = 'scoped memory for tpu_custom_call.1']
    #allocation5 [shape = 'u8[4096]{0}', space=vmem, size = 0x1000, scoped, tag = 'input window, operand 1, single buffered']
    #allocation6 [shape = 's32[1]{0}', space=sflag, size = 0x4, scoped, tag = 'scoped memory for tpu_custom_call.1']
    #allocation7 [shape = 'u8[131072]{0}', space=vmem, size = 0x20000, scoped, tag = 'input window, operand 2, single buffered']
    #allocation8 [shape = 'u8[4096]{0}', space=vmem, size = 0x1000, scoped, tag = 'output window, operand 0, single buffered']
    %8 = vsyncpa [#allocation3], 0
    %9 = vsyncpa [#allocation6], 0
    %10 = vsyncpa [#allocation4], 0
    // Predicated region
    $region2: #{tpu_custom_call.1} parent=1 // pred_check
      _
    $region3: #{tpu_custom_call.1} parent=1 // pred_check_branch
      %12 = sbr.rel (0) target = $region5
    $region4: #{tpu_custom_call.1} parent=1 // pred_region
      %14 = vsyncadd [#allocation3], 0
      %s16 = sshll.u32 %s0, 4
      %s17 = int_to_ptr.hbm [resolvable:$true] %s16
      %s18 = sshll.u32 [#allocation2], 4
      %s19 = int_to_ptr.vmem [resolvable:$true] %s18
      %21 = dma.hbm_to_vmem [thread:$0]  %s17, 128, %s19, [#allocation3]
    $region5: #{tpu_custom_call.1} parent=1 // pred_fallthru
      _
    // Predicated region
    $region6: #{tpu_custom_call.1} parent=1 // pred_check
      _
    $region7: #{tpu_custom_call.1} parent=1 // pred_check_branch
      %23 = sbr.rel (0) target = $region9
    $region8: #{tpu_custom_call.1} parent=1 // pred_region
      %s24 = sadd.s32 0, 1
      %26 = vsyncadd [#allocation6], 0
      %s27 = smul.addr %s24, 8
      %s28 = scalar_lea.hbm %s1, %s27
      %s30 = sshll.u32 %s28, 4
      %s31 = int_to_ptr.hbm [resolvable:$true] %s30
      %s32 = sshll.u32 [#allocation5], 4
      %s33 = int_to_ptr.vmem [resolvable:$true] %s32
      %35 = dma.hbm_to_vmem [thread:$0]  %s31, 128, %s33, [#allocation6]
    $region9: #{tpu_custom_call.1} parent=1 // pred_fallthru
      _
    // Predicated region
    $region10: #{tpu_custom_call.1} parent=1 // pred_check
      _
    $region11: #{tpu_custom_call.1} parent=1 // pred_check_branch
      %37 = sbr.rel (0) target = $region13
    $region12: #{tpu_custom_call.1} parent=1 // pred_region
      %39 = vsyncadd [#allocation6], 0
      %s40 = sshll.u32 %s2, 4
      %s41 = int_to_ptr.hbm [resolvable:$true] %s40
      %s42 = sshll.u32 [#allocation7], 4
      %s43 = int_to_ptr.vmem [resolvable:$true] %s42
      %48 = dma.hbm_to_vmem [thread:$0]  %s41, 4096, %s43, [#allocation6], 128, 128, 8
    $region13: #{tpu_custom_call.1} parent=1 // pred_fallthru
      _
    // Predicated region
    $region14: #{tpu_custom_call.1} parent=1 // pred_check
      _
    $region15: #{tpu_custom_call.1} parent=1 // pred_check_branch
      %50 = sbr.rel (0) target = $region17
    $region16: #{tpu_custom_call.1} parent=1 // pred_region
      %52 = dma.done [#allocation3], 128
    $region17: #{tpu_custom_call.1} parent=1 // pred_fallthru
      _
    // Predicated region
    $region18: #{tpu_custom_call.1} parent=1 // pred_check
      _
    $region19: #{tpu_custom_call.1} parent=1 // pred_check_branch
      %54 = sbr.rel (0) target = $region21
    $region20: #{tpu_custom_call.1} parent=1 // pred_region
      %56 = dma.done [#allocation6], 128
    $region21: #{tpu_custom_call.1} parent=1 // pred_fallthru
      _
    // Predicated region
    $region22: #{tpu_custom_call.1} parent=1 // pred_check
      _
    $region23: #{tpu_custom_call.1} parent=1 // pred_check_branch
      %58 = sbr.rel (0) target = $region25
    $region24: #{tpu_custom_call.1} parent=1 // pred_region
      %60 = dma.done [#allocation6], 4096
    $region25: #{tpu_custom_call.1} parent=1 // pred_fallthru
      _
    %s61 = sadd.s32 0, 1
    %v62 = vld [vmem:[#allocation2] sm:$0xff]
    %v63 = vld [vmem:[#allocation7] sm:$0xff]
    %v64 = vld [vmem:[#allocation7 + $0x8] sm:$0xff]
    %v65 = vld [vmem:[#allocation7 + $0x10] sm:$0xff]
    %v66 = vld [vmem:[#allocation7 + $0x18] sm:$0xff]
    %v67 = vld [vmem:[#allocation7 + $0x20] sm:$0xff]
    %v68 = vld [vmem:[#allocation7 + $0x28] sm:$0xff]
    %v69 = vld [vmem:[#allocation7 + $0x30] sm:$0xff]
    %v70 = vld [vmem:[#allocation7 + $0x38] sm:$0xff]
    %v71 = vld [vmem:[#allocation7 + $0x40] sm:$0xff]
    %v72 = vld [vmem:[#allocation7 + $0x48] sm:$0xff]
    %v73 = vld [vmem:[#allocation7 + $0x50] sm:$0xff]
    %v74 = vld [vmem:[#allocation7 + $0x58] sm:$0xff]
    %v75 = vld [vmem:[#allocation7 + $0x60] sm:$0xff]
    %v76 = vld [vmem:[#allocation7 + $0x68] sm:$0xff]
    %v77 = vld [vmem:[#allocation7 + $0x70] sm:$0xff]
    %v78 = vld [vmem:[#allocation7 + $0x78] sm:$0xff]
    %v79 = vld [vmem:[#allocation5] sm:$0xff]
    %v80 = vld [vmem:[#allocation7 + $0x80] sm:$0xff]
    %v81 = vld [vmem:[#allocation7 + $0x88] sm:$0xff]
    %v82 = vld [vmem:[#allocation7 + $0x90] sm:$0xff]
    %v83 = vld [vmem:[#allocation7 + $0x98] sm:$0xff]
    %v84 = vld [vmem:[#allocation7 + $0xa0] sm:$0xff]
    %v85 = vld [vmem:[#allocation7 + $0xa8] sm:$0xff]
    %v86 = vld [vmem:[#allocation7 + $0xb0] sm:$0xff]
    %v87 = vld [vmem:[#allocation7 + $0xb8] sm:$0xff]
    %v88 = vld [vmem:[#allocation7 + $0xc0] sm:$0xff]
    %v89 = vld [vmem:[#allocation7 + $0xc8] sm:$0xff]
    %v90 = vld [vmem:[#allocation7 + $0xd0] sm:$0xff]
    %v91 = vld [vmem:[#allocation7 + $0xd8] sm:$0xff]
    %v92 = vld [vmem:[#allocation7 + $0xe0] sm:$0xff]
    %v93 = vld [vmem:[#allocation7 + $0xe8] sm:$0xff]
    %v94 = vld [vmem:[#allocation7 + $0xf0] sm:$0xff]
    %v95 = vld [vmem:[#allocation7 + $0xf8] sm:$0xff]
    %96 = vmatpush.msra.mxu0 %v95
    %97 = vmatpush.msra.mxu0 %v94
    %98 = vmatpush.msra.mxu0 %v93
    %99 = vmatpush.msra.mxu0 %v92
    %100 = vmatpush.msra.mxu0 %v91
    %101 = vmatpush.msra.mxu0 %v90
    %102 = vmatpush.msra.mxu0 %v89
    %103 = vmatpush.msra.mxu0 %v88
    %104 = vmatpush.msra.mxu0 %v87
    %105 = vmatpush.msra.mxu0 %v86
    %106 = vmatpush.msra.mxu0 %v85
    %107 = vmatpush.msra.mxu0 %v84
    %108 = vmatpush.msra.mxu0 %v83
    %109 = vmatpush.msra.mxu0 %v82
    %110 = vmatpush.msra.mxu0 %v81
    %111 = vmatpush.msra.mxu0 %v80
    %112 = vmatmul.f32.gmra.mxu0 %v79
    %v113 = vpop.f32.mrf.mxu0
    %v114 = vadd.f32 0.0, %v113
    %115 = vdwg.mxu0
    %116 = vmatpush.msra.mxu0 %v78
    %117 = vmatpush.msra.mxu0 %v77
    %118 = vmatpush.msra.mxu0 %v76
    %119 = vmatpush.msra.mxu0 %v75
    %120 = vmatpush.msra.mxu0 %v74
    %121 = vmatpush.msra.mxu0 %v73
    %122 = vmatpush.msra.mxu0 %v72
    %123 = vmatpush.msra.mxu0 %v71
    %124 = vmatpush.msra.mxu0 %v70
    %125 = vmatpush.msra.mxu0 %v69
    %126 = vmatpush.msra.mxu0 %v68
    %127 = vmatpush.msra.mxu0 %v67
    %128 = vmatpush.msra.mxu0 %v66
    %129 = vmatpush.msra.mxu0 %v65
    %130 = vmatpush.msra.mxu0 %v64
    %131 = vmatpush.msra.mxu0 %v63
    %132 = vmatmul.f32.gmra.mxu0 %v62
    %v133 = vpop.f32.mrf.mxu0
    %v134 = vadd.f32 %v114, %v133
    %135 = vdwg.mxu0
    %136 = vst [vmem:[#allocation8] sm:$0xff] %v134
    // Predicated region
    $region26: #{tpu_custom_call.1} parent=1 // pred_check
      _
    $region27: #{tpu_custom_call.1} parent=1 // pred_check_branch
      %138 = sbr.rel (0) target = $region29
    $region28: #{tpu_custom_call.1} parent=1 // pred_region
      %140 = vsyncadd [#allocation4], 0
      %s142 = sshll.u32 [#allocation8], 4
      %s143 = int_to_ptr.vmem [resolvable:$true] %s142
      %s144 = sshll.u32 %s3, 4
      %s145 = int_to_ptr.hbm [resolvable:$true] %s144
      %147 = dma.vmem_to_hbm [thread:$0]  %s143, 128, %s145, [#allocation4]
    $region29: #{tpu_custom_call.1} parent=1 // pred_fallthru
      _
    // Predicated region
    $region30: #{tpu_custom_call.1} parent=1 // pred_check
      _
    $region31: #{tpu_custom_call.1} parent=1 // pred_check_branch
      %149 = sbr.rel (0) target = $region33
    $region32: #{tpu_custom_call.1} parent=1 // pred_region
      %151 = dma.done [#allocation4], 128
    $region33: #{tpu_custom_call.1} parent=1 // pred_fallthru
      _
    %152 = vsyncpa [#allocation3], 1
    %153 = vsyncpa [#allocation6], 1
    %154 = vsyncpa [#allocation4], 1

</llo_original>
